<compile_context>
chip_gen: v7x
topology: tpu7x:2x2x1
jax: 0.10.0
libtpu: 0.0.40
codegen_flags: <defaults>
</compile_context>

<pallas_src>
import jax
import jax.numpy as jnp
from jax.experimental import pallas as pl
from jax.experimental.pallas import tpu as pltpu


_TARGET_BLOCK_BYTES = 4 * 1024 * 1024   # ~4 MiB per in/out block
_VMEM_LIMIT_BYTES = 32 * 1024 * 1024    # explicit scoped-VMEM budget


def _round_up(a, b):
    return ((a + b - 1) // b) * b


def _pick_cols(m):
    """Largest lane-dense column count (multiple of 128) dividing m."""
    for c in (2048, 1536, 1024, 768, 512, 384, 256, 128):
        if m % c == 0:
            return c
    return None


def _drop_path_kernel(x_ref, scale_ref, o_ref):
    # x_ref: (tile_rows, C); scale_ref: (tile_rows, 1) broadcast over lanes.
    o_ref[...] = x_ref[...] * scale_ref[...]


def drop_path(x, drop_prob=0.0, training=False, key=None, seed=0):
    """Pallas DropPath. x: (B, ...) with the mask broadcast over trailing dims."""
    if drop_prob == 0.0 or not training:
        return x
    keep_prob = 1.0 - float(drop_prob)
    if key is None:
        # TODO(synk): callers in a real training loop must pass a fresh key per step.
        key = jax.random.PRNGKey(seed)

    orig_shape = x.shape
    B = x.shape[0]
    M = 1
    for d in x.shape[1:]:
        M *= d

    # Per-sample Bernoulli(keep_prob) mask -> per-sample scale in x's dtype.
    mask = jax.random.bernoulli(key, p=keep_prob, shape=(B,))
    scale = (mask.astype(jnp.float32) / keep_prob).astype(x.dtype)

    # ---- Lane/sublane-dense 2-D layout: (B*R, C) with C a multiple of 128 ----
    C = _pick_cols(M)
    if C is None:
        M_pad = _round_up(M, 128)
        C = _pick_cols(M_pad)
    else:
        M_pad = M
    R = M_pad // C
    T = B * R

    x_flat = x.reshape(B, M)
    if M_pad != M:
        x_flat = jnp.pad(x_flat, ((0, 0), (0, M_pad - M)))
    x2 = x_flat.reshape(T, C)
    # Per-row scale: row r belongs to sample r // R.
    scale2 = jnp.broadcast_to(scale.reshape(B, 1), (B, R)).reshape(T, 1)

    # ---- Row tiling: ~4 MiB blocks, sublane dim a multiple of 8 ----
    itemsize = jnp.dtype(x.dtype).itemsize
    target_rows = max(8, (_TARGET_BLOCK_BYTES // (C * itemsize)) // 8 * 8)
    tile_rows = T if target_rows >= T else target_rows
    # Keep >= 2 grid steps so v7x megacore can split the work across both TCs.
    if pl.cdiv(T, tile_rows) < 2 and T >= 16:
        tile_rows = max(8, _round_up(pl.cdiv(T, 2), 8))
    grid_t = pl.cdiv(T, tile_rows)

    y2 = pl.pallas_call(
        _drop_path_kernel,
        out_shape=jax.ShapeDtypeStruct((T, C), x.dtype),
        grid_spec=pltpu.PrefetchScalarGridSpec(
            num_scalar_prefetch=0,
            grid=(grid_t,),
            in_specs=[
                pl.BlockSpec((tile_rows, C), lambda i: (i, 0)),
                pl.BlockSpec((tile_rows, 1), lambda i: (i, 0)),
            ],
            out_specs=pl.BlockSpec((tile_rows, C), lambda i: (i, 0)),
        ),
        compiler_params=pltpu.CompilerParams(
            dimension_semantics=("parallel",),
            vmem_limit_bytes=_VMEM_LIMIT_BYTES,
        ),
    )(x2, scale2)

    y = y2.reshape(B, M_pad)
    if M_pad != M:
        y = y[:, :M]
    return y.reshape(orig_shape)


class DropPath:
    """Mirror of the PyTorch nn.Module (no parameters)."""

    def __init__(self, drop_prob=None):
        self.drop_prob = 0.0 if drop_prob is None else drop_prob
        self.training = True

    def __call__(self, x, key=None, seed=0):
        return drop_path(x, self.drop_prob, self.training, key=key, seed=seed)


if __name__ == "__main__":
    key = jax.random.PRNGKey(0)
    drop_prob = 0.25
    keep_prob = 1.0 - drop_prob

    # ViT-like per-token activations: (batch, tokens, hidden).
    B, N, D = 2, 8, 32
    x = jax.random.normal(key, (B, N, D), dtype=jnp.float32)

    module = DropPath(drop_prob=drop_prob)

    # Training path (kernel).
    module.training = True
    y = jax.block_until_ready(module(x, key=jax.random.PRNGKey(1234)))

    # Sanity: each sample must be either all-zeros or x / keep_prob.
    for b in range(B):
        yb = y[b]
        is_zero = bool(jnp.all(yb == 0.0))
        is_scaled = bool(jnp.allclose(yb, x[b] / keep_prob, rtol=1e-6, atol=1e-6))
        assert is_zero or is_scaled, f"sample {b}: not a valid drop-path output"

    # A shape whose per-sample size is not a multiple of 128 (exercises padding path).
    x_odd = jax.random.normal(jax.random.PRNGKey(2), (2, 3, 5, 7), dtype=jnp.float32)
    y_odd = jax.block_until_ready(
        drop_path(x_odd, drop_prob, training=True, key=jax.random.PRNGKey(7)))
    for b in range(2):
        yb = y_odd[b]
        ok = bool(jnp.all(yb == 0.0)) or bool(
            jnp.allclose(yb, x_odd[b] / keep_prob, rtol=1e-6, atol=1e-6))
        assert ok, f"odd-shape sample {b}: not a valid drop-path output"

    # Eval path (identity, no kernel launch needed).
    module.training = False
    y_eval = jax.block_until_ready(module(x))
    assert bool(jnp.allclose(y_eval, x))

    print("KERNEL_OK")
</pallas_src>

<mosaic_0001>
module attributes {stable_mosaic.version = 11 : i64} {
  func.func @_drop_path_kernel(%arg0: i32, %arg1: memref<2x256xf32, #tpu.memory_space<vmem>>, %arg2: memref<2x1xf32, #tpu.memory_space<vmem>>, %arg3: memref<2x256xf32, #tpu.memory_space<vmem>>) attributes {dimension_semantics = [#tpu.dimension_semantics<parallel>], iteration_bounds = array<i64: 1>, scalar_prefetch = 0 : i64, scratch_operands = 0 : i64, tpu.core_type = #tpu.core_type<tc>, window_params = [{transform_indices = @transform_0, window_bounds = array<i64: 2, 256>}, {transform_indices = @transform_1, window_bounds = array<i64: 2, 1>}, {transform_indices = @transform_2, window_bounds = array<i64: 2, 256>}]} {
    %c0 = arith.constant 0 : index
    %c0_0 = arith.constant 0 : index
    %0 = vector.load %arg1[%c0, %c0_0] : memref<2x256xf32, #tpu.memory_space<vmem>>, vector<2x256xf32>
    %c0_1 = arith.constant 0 : index
    %c0_2 = arith.constant 0 : index
    %1 = vector.load %arg2[%c0_1, %c0_2] : memref<2x1xf32, #tpu.memory_space<vmem>>, vector<2x1xf32>
    %2 = vector.broadcast %1 : vector<2x1xf32> to vector<2x256xf32>
    %3 = arith.mulf %0, %2 : vector<2x256xf32>
    %c0_3 = arith.constant 0 : index
    %c0_4 = arith.constant 0 : index
    %4 = vector.load %arg3[%c0_3, %c0_4] : memref<2x256xf32, #tpu.memory_space<vmem>>, vector<2x256xf32>
    tpu.vector_store %arg3[%c0_3, %c0_4], %3 {strides = array<i32>} : memref<2x256xf32, #tpu.memory_space<vmem>>, vector<2x256xf32>,
    return
  }
  func.func @transform_0(%arg0: i32) -> (i32, i32) {
    %c0_i32 = arith.constant 0 : i32
    %c0_i32_0 = arith.constant 0 : i32
    return %arg0, %c0_i32 : i32, i32
  }
  func.func @transform_1(%arg0: i32) -> (i32, i32) {
    %c0_i32 = arith.constant 0 : i32
    %c0_i32_0 = arith.constant 0 : i32
    return %arg0, %c0_i32 : i32, i32
  }
  func.func @transform_2(%arg0: i32) -> (i32, i32) {
    %c0_i32 = arith.constant 0 : i32
    %c0_i32_0 = arith.constant 0 : i32
    return %arg0, %c0_i32 : i32, i32
  }
}

</mosaic_0001>

<llo_original>
// kernel: tpu_custom_call.1
$region0: #{tpu_custom_call.1}
  #allocation0 [shape = 'u32[]', space=smem, size = 0x4, offset = 0x4, fixed_abs, tag = 'smem constant byte address 0x4 - core index']
  #allocation1 [shape = 'u32[144,128]{1,0:T(1,128)}', space=vmem, size = 0x12000, scoped, tag = 'internal scratch']
  %s0 = inlined_call_operand.hbm [shape: f32[2,256], index: 0, kind: input, shape index: {}]
  %s1 = inlined_call_operand.vmem [shape: f32[2,1], index: 1, kind: input, shape index: {}]
  %s2 = inlined_call_operand.hbm [shape: f32[2,256], index: 2, kind: output, shape index: {}]
  %s3 = sld [smem:[#allocation0]]
  $region22: #{tpu_custom_call.1} parent=0
    _
  %s5 = ssub.s32 1, %s3
  %s6 = scalar_select 0, %s5, %s3
  $region1: #{tpu_custom_call.1} parent=0
    #allocation2 [shape = 'u8[2048]{0}', space=vmem, size = 0x800, scoped, tag = 'input window, operand 0, single buffered']
    #allocation3 [shape = 's32[1]{0}', space=sflag, size = 0x4, scoped, tag = 'scoped memory for tpu_custom_call.1']
    #allocation4 [shape = 's32[1]{0}', space=sflag, size = 0x4, scoped, tag = 'scoped memory for tpu_custom_call.1']
    #allocation5 [shape = 'u8[2048]{0}', space=vmem, size = 0x800, scoped, tag = 'output window, operand 0, single buffered']
    %7 = vsyncpa [#allocation3], 0
    %8 = vsyncpa [#allocation4], 0
    // Predicated region
    $region2: #{tpu_custom_call.1} parent=1 // pred_check
      _
    $region3: #{tpu_custom_call.1} parent=1 // pred_check_branch
      %10 = sbr.rel (0) target = $region5
    $region4: #{tpu_custom_call.1} parent=1 // pred_region
      %s12 = ssub.s32 64, 64
      %13 = vsyncadd [#allocation3], %s12
      %s15 = sshll.u32 [#allocation2], 4
      %s16 = int_to_ptr.vmem [resolvable:$true] %s15
      %18 = dma.hbm_to_vmem [thread:$0]  %s0, 64, %s16, [#allocation3]
    $region5: #{tpu_custom_call.1} parent=1 // pred_fallthru
      _
    // Predicated region
    $region6: #{tpu_custom_call.1} parent=1 // pred_check
      _
    $region7: #{tpu_custom_call.1} parent=1 // pred_check_branch
      %20 = sbr.rel (0) target = $region9
    $region8: #{tpu_custom_call.1} parent=1 // pred_region
      _
    $region9: #{tpu_custom_call.1} parent=1 // pred_fallthru
      _
    // Predicated region
    $region10: #{tpu_custom_call.1} parent=1 // pred_check
      _
    $region11: #{tpu_custom_call.1} parent=1 // pred_check_branch
      %22 = sbr.rel (0) target = $region13
    $region12: #{tpu_custom_call.1} parent=1 // pred_region
      %23 = dma.done [#allocation3], 64
    $region13: #{tpu_custom_call.1} parent=1 // pred_fallthru
      _
    %v24 = vld [vmem:[#allocation2] sm:$0xf]
    %v25 = vld [vmem:[%s1] sm:$0x3]
    %27 = vset.pattern.permute.xlu0 0
    %28 = vperm.xlu0 %27, %v25
    %v29 = vpop.permute.xlu0 %28
    %v31 = vunpack.c.l.s4 269488144
    %v32 = vunpack.c.0.s8 %v31
    %v33 = vlaneseq
    %v34 = vshrl.u32 %v33, 7
    %v35 = vsub.s32 %v32, %v34
    %v36 = vrot.slane %v29, %v35
    %v38 = vmul.f32 %v24, %v36
    %39 = vst [vmem:[#allocation5] sm:$0xf] %v38
    // Predicated region
    $region14: #{tpu_custom_call.1} parent=1 // pred_check
      _
    $region15: #{tpu_custom_call.1} parent=1 // pred_check_branch
      %41 = sbr.rel (0) target = $region17
    $region16: #{tpu_custom_call.1} parent=1 // pred_region
      %s43 = ssub.s32 64, 64
      %44 = vsyncadd [#allocation4], %s43
      %s46 = sshll.u32 [#allocation5], 4
      %s47 = int_to_ptr.vmem [resolvable:$true] %s46
      %49 = dma.vmem_to_hbm [thread:$0]  %s47, 64, %s2, [#allocation4]
    $region17: #{tpu_custom_call.1} parent=1 // pred_fallthru
      _
    // Predicated region
    $region18: #{tpu_custom_call.1} parent=1 // pred_check
      _
    $region19: #{tpu_custom_call.1} parent=1 // pred_check_branch
      %51 = sbr.rel (0) target = $region21
    $region20: #{tpu_custom_call.1} parent=1 // pred_region
      %52 = dma.done [#allocation4], 64
    $region21: #{tpu_custom_call.1} parent=1 // pred_fallthru
      _
    %53 = vsyncpa [#allocation3], 1
    %54 = vsyncpa [#allocation4], 1

</llo_original>
